<compile_context>
chip_gen: v7x
topology: tpu7x:2x2x1
jax: 0.10.0
libtpu: 0.0.40
codegen_flags: <defaults>
</compile_context>

<pallas_src>
import math

import jax
import jax.numpy as jnp
from jax.experimental import pallas as pl
from jax.experimental.pallas import tpu as pltpu


def _round_up(x: int, m: int) -> int:
    return ((x + m - 1) // m) * m


def _sublane_multiple(out_bytes: int) -> int:
    # second-to-last block dim requirement for the output dtype
    return {4: 8, 2: 16, 1: 32}.get(out_bytes, 8)


def _make_kernel(out_dtype, packed: bool):
    def kernel(x_ref, w_ref, phase_ref, out_ref):
        # x_ref:     (tb, k)            f32   (k == 1 when not packed)
        # w_ref:     (k, k*dim)|(1,dim) f32   (hoisted, constant across grid)
        # phase_ref: (1, k*dim)         f32   (0 for sin half, pi/2 for cos half)
        # out_ref:   (tb, k*dim)        out_dtype
        x = x_ref[...]
        if packed:
            # (tb, k) @ (k, k*dim): block-diagonal freq matrix broadcasts each
            # of the k timesteps across its own dim-wide lane segment (MXU).
            emb = jnp.dot(x, w_ref[...], preferred_element_type=jnp.float32)
        else:
            emb = x * w_ref[...]                       # (tb, dim) broadcast
        # sin(t) / sin(t + pi/2) == sin/cos -> one EUP op per output element,
        # single lane-dense full-block store.
        out_ref[...] = jnp.sin(emb + phase_ref[...]).astype(out_dtype)

    return kernel


def _pick_row_tile(b_phys: int, lane_dim: int, out_bytes: int,
                   sub: int, budget: int) -> int:
    """Rows per grid step: multiple of the out-dtype sublane tile (or the full
    batch), sized so one output tile + one lane-padded x tile fit `budget`."""
    lane_pad = _round_up(lane_dim, 128)
    # output row + (tb, k) f32 input row lane-padded to 128 lanes (512 B/row)
    row_bytes = lane_pad * out_bytes + 128 * 4
    max_rows = max(sub, budget // row_bytes)
    tb = min(b_phys, max_rows)
    tb = (tb // sub) * sub
    if tb <= 0 or tb >= b_phys:
        return b_phys        # single full-extent block (exempt from (8,128))
    return tb


def sinusoidal_pos_emb(x: jax.Array, dim: int, theta: float = 10000.0,
                       out_dtype=jnp.float32) -> jax.Array:
    """Pallas TPU equivalent of SinusoidalPosEmb.forward.

    out_dtype defaults to float32 (matches torch). Pass jnp.bfloat16 when the
    consumer is bf16: compute stays f32, only the HBM write narrows (~2x less
    write traffic in the write-bound large-batch regime).
    """
    if x.ndim == 0:
        x = x[None]                     # mirror torch's x.unsqueeze(0)
    assert x.ndim == 1, "x must be a scalar or 1-D tensor of timesteps"
    assert dim % 2 == 0, "dim must be even (same assumption as the torch module)"
    assert dim >= 4, "dim must be >= 4 (dim == 2 divides by zero in the scale)"

    half_dim = dim // 2
    scale = math.log(theta) / (half_dim - 1)
    # Hoisted tables: exp() once in the wrapper; kernel only does mul/add/sin.
    freqs = jnp.exp(jnp.arange(half_dim, dtype=jnp.float32) * (-scale))
    freqs_full = jnp.concatenate([freqs, freqs])                       # (dim,)
    phase = jnp.concatenate(
        [jnp.zeros((half_dim,), jnp.float32),
         jnp.full((half_dim,), 0.5 * jnp.pi, jnp.float32)])            # (dim,)

    b = x.shape[0]
    out_bytes = jnp.dtype(out_dtype).itemsize

    # Row packing: for dim < 128 pack k = 128 // dim timesteps per physical
    # row so output stores are fully lane-dense (unmasked vst) and the
    # writeback DMA is wide. The final reshape back to (b, dim) is free.
    k = 1
    if dim < 128 and 128 % dim == 0:
        kc = 128 // dim
        if b % kc == 0 and b // kc >= 1:
            k = kc
    packed = k > 1
    b_phys = b // k
    lane_dim = k * dim

    x2d = x.astype(jnp.float32).reshape(b_phys, k)

    if packed:
        # W[j, j*dim + c] = freqs_full[c]  (block-diagonal frequency matrix)
        eye = jnp.eye(k, dtype=jnp.float32)
        w = (eye[:, :, None] * freqs_full[None, None, :]).reshape(k, lane_dim)
        phase_row = jnp.tile(phase, (k,)).reshape(1, lane_dim)
    else:
        w = freqs_full.reshape(1, dim)
        phase_row = phase.reshape(1, dim)

    # Generation-aware VMEM budget: double-buffered tiles must fit every
    # generation's scoped VMEM (v5e/v6e 128 MiB physical, v7x 64 MiB per TC).
    try:
        info = pltpu.get_tpu_info()
        vmem_cap = int(getattr(info, "vmem_capacity_bytes", 64 << 20))
    except Exception:
        vmem_cap = 64 << 20
    budget = min(8 << 20, max(1 << 20, vmem_cap // 16))   # per-buffer budget

    sub = _sublane_multiple(out_bytes)
    tb = _pick_row_tile(b_phys, lane_dim, out_bytes, sub, budget)

    lane_pad = _round_up(lane_dim, 128)
    rows_pad = _round_up(tb, sub)
    need = 2 * (rows_pad * lane_pad * out_bytes        # out tile (x2 buffers)
                + rows_pad * 128 * 4                   # (tb, k) x tile lane-pads to 128
                + 2 * 8 * lane_pad * 4)                # freq + phase rows (padded)
    vmem_limit = int(max(need + need // 4 + (2 << 20), 16 << 20))

    grid = (pl.cdiv(b_phys, tb),)
    kernel = _make_kernel(out_dtype, packed)
    out = pl.pallas_call(
        kernel,
        out_shape=jax.ShapeDtypeStruct((b_phys, lane_dim), out_dtype),
        grid_spec=pltpu.PrefetchScalarGridSpec(
            num_scalar_prefetch=0,
            grid=grid,
            in_specs=[
                pl.BlockSpec((tb, k), lambda i: (i, 0)),         # timesteps
                pl.BlockSpec(w.shape, lambda i: (0, 0)),          # freqs (const)
                pl.BlockSpec((1, lane_dim), lambda i: (0, 0)),    # phase (const)
            ],
            out_specs=pl.BlockSpec((tb, lane_dim), lambda i: (i, 0)),
        ),
        compiler_params=pltpu.CompilerParams(
            dimension_semantics=("parallel",),
            vmem_limit_bytes=vmem_limit,
        ),
    )(x2d, w, phase_row)

    # TODO(synk): for tiny batches (B <= 64, typical diffusion sampling) this
    # embedding should be fused into the first Linear of the time-MLP rather
    # than run as a standalone pallas_call (removes a launch + an HBM
    # round-trip of the embedding); kept standalone to match the module.
    return out.reshape(b, dim)


def _reference(x, dim, theta=10000.0):
    # pure-JAX reference matching the torch code exactly
    if x.ndim == 0:
        x = x[None]
    half_dim = dim // 2
    emb = math.log(theta) / (half_dim - 1)
    emb = jnp.exp(jnp.arange(half_dim, dtype=jnp.float32) * -emb)
    emb = x[:, None].astype(jnp.float32) * emb[None, :]
    return jnp.concatenate((jnp.sin(emb), jnp.cos(emb)), axis=-1)


if __name__ == "__main__":
    key = jax.random.PRNGKey(0)
    dim = 32          # embedding dim (module's `dim`)
    batch = 32        # number of timesteps

    # deterministic example timesteps (like diffusion step indices)
    x = jax.random.uniform(key, (batch,), jnp.float32, 0.0, 1000.0)
    out = jax.block_until_ready(sinusoidal_pos_emb(x, dim))
    ref = _reference(x, dim)
    assert out.shape == (batch, dim), out.shape
    assert jnp.allclose(out, ref, atol=5e-4, rtol=1e-4), "mismatch (packed path)"

    # batch not divisible by the packing factor -> unpacked fallback path
    x2 = jax.random.uniform(jax.random.PRNGKey(1), (13,), jnp.float32, 0.0, 1000.0)
    out2 = jax.block_until_ready(sinusoidal_pos_emb(x2, dim))
    assert jnp.allclose(out2, _reference(x2, dim), atol=5e-4, rtol=1e-4), \
        "mismatch (unpacked path)"

    # dim >= 128 (no packing) with bf16 output (f32 compute, narrow store)
    x3 = jax.random.uniform(jax.random.PRNGKey(2), (16,), jnp.float32, 0.0, 1000.0)
    out3 = jax.block_until_ready(sinusoidal_pos_emb(x3, 128, out_dtype=jnp.bfloat16))
    assert out3.dtype == jnp.bfloat16
    assert jnp.allclose(out3.astype(jnp.float32), _reference(x3, 128),
                        atol=2e-2, rtol=2e-2), "mismatch (bf16 path)"

    # larger batch: multi-step grid with a masked (non-dividing) edge block
    x4 = jax.random.uniform(jax.random.PRNGKey(3), (40000,), jnp.float32, 0.0, 1000.0)
    out4 = jax.block_until_ready(sinusoidal_pos_emb(x4, dim))
    assert jnp.allclose(out4, _reference(x4, dim), atol=5e-4, rtol=1e-4), \
        "mismatch (multi-block / edge path)"

    print("KERNEL_OK")
</pallas_src>

<mosaic_0001>
module attributes {stable_mosaic.version = 11 : i64} {
  func.func @kernel(%arg0: i32, %arg1: memref<8x4xf32, #tpu.memory_space<vmem>>, %arg2: memref<4x128xf32, #tpu.memory_space<vmem>>, %arg3: memref<1x128xf32, #tpu.memory_space<vmem>>, %arg4: memref<8x128xf32, #tpu.memory_space<vmem>>) attributes {dimension_semantics = [#tpu.dimension_semantics<parallel>], iteration_bounds = array<i64: 1>, scalar_prefetch = 0 : i64, scratch_operands = 0 : i64, tpu.core_type = #tpu.core_type<tc>, window_params = [{transform_indices = @transform_0, window_bounds = array<i64: 8, 4>}, {pipeline_mode = #tpu.pipeline_mode<synchronous>, transform_indices = @transform_1, window_bounds = array<i64: 4, 128>}, {pipeline_mode = #tpu.pipeline_mode<synchronous>, transform_indices = @transform_2, window_bounds = array<i64: 1, 128>}, {transform_indices = @transform_3, window_bounds = array<i64: 8, 128>}]} {
    %c0 = arith.constant 0 : index
    %c0_0 = arith.constant 0 : index
    %0 = vector.load %arg1[%c0, %c0_0] : memref<8x4xf32, #tpu.memory_space<vmem>>, vector<8x4xf32>
    %c0_1 = arith.constant 0 : index
    %c0_2 = arith.constant 0 : index
    %1 = vector.load %arg2[%c0_1, %c0_2] : memref<4x128xf32, #tpu.memory_space<vmem>>, vector<4x128xf32>
    %cst = arith.constant dense<0.000000e+00> : vector<8x128xf32>
    %2 = tpu.matmul %0, %1, %cst {dimension_numbers = #tpu.dot_dimension_numbers<[1], [0], [0], [1], [0, 0, 1, 1], [], []>} : vector<8x4xf32>, vector<4x128xf32>, vector<8x128xf32> -> vector<8x128xf32>
    %c0_3 = arith.constant 0 : index
    %c0_4 = arith.constant 0 : index
    %3 = vector.load %arg3[%c0_3, %c0_4] : memref<1x128xf32, #tpu.memory_space<vmem>>, vector<1x128xf32>
    %4 = vector.broadcast %3 : vector<1x128xf32> to vector<8x128xf32>
    %5 = arith.addf %2, %4 : vector<8x128xf32>
    %6 = math.sin %5 : vector<8x128xf32>
    %c0_5 = arith.constant 0 : index
    %c0_6 = arith.constant 0 : index
    %7 = vector.load %arg4[%c0_5, %c0_6] : memref<8x128xf32, #tpu.memory_space<vmem>>, vector<8x128xf32>
    tpu.vector_store %arg4[%c0_5, %c0_6], %6 {strides = array<i32>} : memref<8x128xf32, #tpu.memory_space<vmem>>, vector<8x128xf32>,
    return
  }
  func.func @transform_0(%arg0: i32) -> (i32, i32) {
    %c0_i32 = arith.constant 0 : i32
    %c0_i32_0 = arith.constant 0 : i32
    return %arg0, %c0_i32 : i32, i32
  }
  func.func @transform_1(%arg0: i32) -> (i32, i32) {
    %c0_i32 = arith.constant 0 : i32
    %c0_i32_0 = arith.constant 0 : i32
    %c0_i32_1 = arith.constant 0 : i32
    return %c0_i32, %c0_i32_0 : i32, i32
  }
  func.func @transform_2(%arg0: i32) -> (i32, i32) {
    %c0_i32 = arith.constant 0 : i32
    %c0_i32_0 = arith.constant 0 : i32
    %c0_i32_1 = arith.constant 0 : i32
    return %c0_i32, %c0_i32_0 : i32, i32
  }
  func.func @transform_3(%arg0: i32) -> (i32, i32) {
    %c0_i32 = arith.constant 0 : i32
    %c0_i32_0 = arith.constant 0 : i32
    return %arg0, %c0_i32 : i32, i32
  }
}

</mosaic_0001>

<llo_original>
// kernel: tpu_custom_call.1
$region0: #{tpu_custom_call.1}
  #allocation0 [shape = 'u32[]', space=smem, size = 0x4, offset = 0x4, fixed_abs, tag = 'smem constant byte address 0x4 - core index']
  #allocation1 [shape = 'u32[144,128]{1,0:T(1,128)}', space=vmem, size = 0x12000, scoped, tag = 'internal scratch']
  %s0 = inlined_call_operand.vmem [shape: f32[8,4], index: 0, kind: input, shape index: {}]
  %s1 = inlined_call_operand.vmem [shape: f32[4,128], index: 1, kind: input, shape index: {}]
  %s2 = inlined_call_operand.vmem [shape: f32[1,128], index: 2, kind: input, shape index: {}]
  %s3 = inlined_call_operand.hbm [shape: f32[8,128], index: 3, kind: output, shape index: {}]
  %s4 = sld [smem:[#allocation0]]
  $region22: #{tpu_custom_call.1} parent=0
    _
  %s6 = ssub.s32 1, %s4
  %s7 = scalar_select 0, %s6, %s4
  $region1: #{tpu_custom_call.1} parent=0
    #allocation2 [shape = 'u8[4096]{0}', space=vmem, size = 0x1000, scoped, tag = 'output window, operand 0, single buffered']
    #allocation3 [shape = 's32[1]{0}', space=sflag, size = 0x4, scoped, tag = 'scoped memory for tpu_custom_call.1']
    %8 = vsyncpa [#allocation3], 0
    // Predicated region
    $region2: #{tpu_custom_call.1} parent=1 // pred_check
      _
    $region3: #{tpu_custom_call.1} parent=1 // pred_check_branch
      %10 = sbr.rel (0) target = $region5
    $region4: #{tpu_custom_call.1} parent=1 // pred_region
      _
    $region5: #{tpu_custom_call.1} parent=1 // pred_fallthru
      _
    // Predicated region
    $region6: #{tpu_custom_call.1} parent=1 // pred_check
      _
    $region7: #{tpu_custom_call.1} parent=1 // pred_check_branch
      %12 = sbr.rel (0) target = $region9
    $region8: #{tpu_custom_call.1} parent=1 // pred_region
      _
    $region9: #{tpu_custom_call.1} parent=1 // pred_fallthru
      _
    // Predicated region
    $region10: #{tpu_custom_call.1} parent=1 // pred_check
      _
    $region11: #{tpu_custom_call.1} parent=1 // pred_check_branch
      %14 = sbr.rel (0) target = $region13
    $region12: #{tpu_custom_call.1} parent=1 // pred_region
      _
    $region13: #{tpu_custom_call.1} parent=1 // pred_fallthru
      _
    %v15 = vld [vmem:[%s0] sm:$0xff]
    %v16 = vld [vmem:[%s1] sm:$0xf]
    %v17 = vld [vmem:[%s2] sm:$0x1]
    %v19 = vlaneseq
    %v20 = vshrl.u32 %v19, 7
    %v21 = vsub.s32 0, %v20
    %v22 = vrot.slane %v17, %v21
    %vm24 = vcmask 31744
    %v26 = vsel %vm24, %v15, 0
    %vm28 = vcmask 1043456
    %v30 = vsel %vm28, %v16, 0
    %32 = vmatprep.subr.mxu0 0.0
    %33 = vmatpush1.msra.mxu0 %v30
    %34 = vmatprep.subr.mxu0 0.0
    %35 = vmatpush1.msra.mxu0 0.0
    %36 = vmatprep.subr.mxu0 0.0
    %37 = vmatpush1.msra.mxu0 0.0
    %38 = vmatprep.subr.mxu0 0.0
    %39 = vmatpush1.msra.mxu0 0.0
    %40 = vmatprep.subr.mxu0 0.0
    %41 = vmatpush1.msra.mxu0 0.0
    %42 = vmatprep.subr.mxu0 0.0
    %43 = vmatpush1.msra.mxu0 0.0
    %44 = vmatprep.subr.mxu0 0.0
    %45 = vmatpush1.msra.mxu0 0.0
    %46 = vmatprep.subr.mxu0 0.0
    %47 = vmatpush1.msra.mxu0 0.0
    %48 = vmatprep.subr.mxu0 0.0
    %49 = vmatpush1.msra.mxu0 0.0
    %50 = vmatprep.subr.mxu0 0.0
    %51 = vmatpush1.msra.mxu0 0.0
    %52 = vmatprep.subr.mxu0 0.0
    %53 = vmatpush1.msra.mxu0 0.0
    %54 = vmatprep.subr.mxu0 0.0
    %55 = vmatpush1.msra.mxu0 0.0
    %56 = vmatprep.subr.mxu0 0.0
    %57 = vmatpush1.msra.mxu0 0.0
    %58 = vmatprep.subr.mxu0 0.0
    %59 = vmatpush1.msra.mxu0 0.0
    %60 = vmatprep.subr.mxu0 0.0
    %61 = vmatpush1.msra.mxu0 0.0
    %62 = vmatprep.subr.mxu0 0.0
    %63 = vmatpush1.msra.mxu0 0.0
    %64 = vmatprep.subr.mxu0 0.0
    %65 = vmatpush1.msra.mxu0 0.0
    %66 = vmatprep.subr.mxu0 0.0
    %67 = vmatpush1.msra.mxu0 0.0
    %68 = vmatprep.subr.mxu0 0.0
    %69 = vmatpush1.msra.mxu0 0.0
    %70 = vmatprep.subr.mxu0 0.0
    %71 = vmatpush1.msra.mxu0 0.0
    %72 = vmatprep.subr.mxu0 0.0
    %73 = vmatpush1.msra.mxu0 0.0
    %74 = vmatprep.subr.mxu0 0.0
    %75 = vmatpush1.msra.mxu0 0.0
    %76 = vmatprep.subr.mxu0 0.0
    %77 = vmatpush1.msra.mxu0 0.0
    %78 = vmatprep.subr.mxu0 0.0
    %79 = vmatpush1.msra.mxu0 0.0
    %80 = vmatprep.subr.mxu0 0.0
    %81 = vmatpush1.msra.mxu0 0.0
    %82 = vmatprep.subr.mxu0 0.0
    %83 = vmatpush1.msra.mxu0 0.0
    %84 = vmatprep.subr.mxu0 0.0
    %85 = vmatpush1.msra.mxu0 0.0
    %86 = vmatprep.subr.mxu0 0.0
    %87 = vmatpush1.msra.mxu0 0.0
    %88 = vmatprep.subr.mxu0 0.0
    %89 = vmatpush1.msra.mxu0 0.0
    %90 = vmatprep.subr.mxu0 0.0
    %91 = vmatpush1.msra.mxu0 0.0
    %92 = vmatprep.subr.mxu0 0.0
    %93 = vmatpush1.msra.mxu0 0.0
    %94 = vmatprep.subr.mxu0 0.0
    %95 = vmatpush1.msra.mxu0 0.0
    %96 = vmatprep.mubr.f32.mxu0 0.0
    %97 = vmatmul.mubr.f32.gmra.mrb[0].mxu0 %v26
    %v98 = vpop.f32.mrb[0].mxu0
    %v99 = vadd.f32 %v22, %v98
    %v100 = vpop.f32.mrb[0].mxu0
    %101 = vdwg.mxu0
    %v102 = vand.u32 2147483647, %v99
    %vm103 = vcmp.le.f32.partialorder %v102, 0.7853982
    %vm104 = vcmp.lt.s32.totalorder %v99, 0
    %v105 = vand.u32 %v99, 2139095040
    %v106 = vshrl.u32 %v105, 23
    %v107 = vsub.s32 %v106, 127
    %v108 = vand.u32 2147483647, %v99
    %v109 = vand.u32 %v108, 8388607
    %v110 = vor.u32 %v109, 8388608
    %v111 = vsub.s32 0, %v110
    %v112 = vadd.s32 %v107, 1
    %vm113 = vcmp.gt.s32.totalorder %v112, 0
    %v114 = vsel %vm113, %v112, 0
    %v115 = vshrl.u32 %v114, 5
    %v116 = vand.u32 %v114, 31
    %v117 = vsub.s32 32, %v116
    %v118 = vshrl.u32 683565275, %v117
    %v119 = vshll.u32 683565275, %v116
    %v120 = vshrl.u32 2475754826, %v117
    %v121 = vor.u32 %v119, %v120
    %v122 = vshll.u32 2475754826, %v116
    %v123 = vshrl.u32 2131351028, %v117
    %v124 = vor.u32 %v122, %v123
    %v125 = vshll.u32 2131351028, %v116
    %v126 = vshrl.u32 2102212464, %v117
    %v127 = vor.u32 %v125, %v126
    %v128 = vshll.u32 2102212464, %v116
    %v129 = vshrl.u32 920167782, %v117
    %v130 = vor.u32 %v128, %v129
    %v131 = vshll.u32 920167782, %v116
    %v132 = vshrl.u32 1326507024, %v117
    %v133 = vor.u32 %v131, %v132
    %vm134 = vcmp.lt.s32.totalorder %v115, 1
    %vm135 = vcmp.lt.s32.totalorder %v115, 2
    %vm136 = vcmp.lt.s32.totalorder %v115, 3
    %vm137 = vcmp.lt.s32.totalorder %v115, 4
    %v138 = vsel %vm134, %v118, %v121
    %v139 = vsel %vm137, %v127, 2102212464
    %v140 = vsel %vm136, %v124, %v139
    %v141 = vsel %vm135, %v138, %v140
    %v142 = vsel %vm134, %v121, %v124
    %v143 = vsel %vm137, %v130, 920167782
    %v144 = vsel %vm136, %v127, %v143
    %v145 = vsel %vm135, %v142, %v144
    %v146 = vsel %vm134, %v124, %v127
    %v147 = vsel %vm137, %v133, 1326507024
    %v148 = vsel %vm136, %v130, %v147
    %v149 = vsel %vm135, %v146, %v148
    %v150 = vshll.u32 %v110, 8
    %v151 = vmul.u32.u64.compose %v150, %v149
    %v152 = vextract.low.u32 %v151
    %v153 = vextract.high.u32 %v151
    %v154 = vmul.u32.u64.compose %v150, %v145
    %v155 = vextract.low.u32 %v154
    %v156 = vextract.high.u32 %v154
    %v157 = vmul.u32 %v150, %v141
    %v158 = vadd.s32 %v153, %v155
    %vm159 = vc.u32 %v153, %v155
    %v160 = vadd.s32 %v156, 1
    %v161 = vsel %vm159, %v160, %v156
    %v162 = vadd.s32 %v157, %v161
    %v163 = vadd.s32 %v162, 536870912
    %v164 = vshrl.u32 %v163, 30
    %v165 = vshll.u32 %v164, 30
    %v166 = vsub.s32 %v162, %v165
    %vm167 = vcmp.lt.s32.totalorder %v166, 0
    %v168 = vsub.s32 0, %v166
    %v169 = vsel %vm167, %v168, %v166
    %v170 = vclz %v169
    %v171 = vsub.s32 %v170, 2
    %vm172 = vcmp.gt.s32.totalorder 0, %v171
    %v173 = vsel %vm172, 0, %v171
    %v174 = vsub.s32 32, %v173
    %v175 = vshll.u32 %v166, %v173
    %v176 = vshrl.u32 %v158, %v174
    %v177 = vor.u32 %v175, %v176
    %v178 = vsub.s32 4294967266, %v173
    %v179 = vadd.s32 %v178, 127
    %v180 = vshll.u32 %v179, 23
    %v181 = vor.u32 4788187, %v180
    %v182 = vand.u32 2147483647, %v181
    %v184 = vcvt.s32.f32 %v177
    %v185 = vmul.f32 %v184, %v182
    %v186 = vxor.u32 %v185, 2147483648
    %v187 = vsel %vm104, %v186, %v185
    %v188 = vsub.s32 4, %v164
    %v189 = vsel %vm104, %v188, %v164
    %v190 = vsel %vm103, %v99, %v187
    %v191 = vsel %vm103, 0, %v189
    %v192 = vcosq.f32.pop %v190
    %v193 = vsinq.f32.pop %v190
    %vm194 = vweird.f32 %v99
    %v195 = vadd.s32 %v191, 3
    %v196 = vand.u32 %v195, 3
    %vm197 = vcmp.lt.s32.totalorder %v196, 2
    %vm198 = vcmp.eq.s32.totalorder %v196, 0
    %v199 = vxor.u32 %v193, 2147483648
    %v200 = vsel %vm198, %v192, %v199
    %vm201 = vcmp.eq.s32.totalorder %v196, 2
    %v202 = vxor.u32 %v192, 2147483648
    %v203 = vsel %vm201, %v202, %v193
    %v204 = vsel %vm197, %v200, %v203
    %v205 = vsel %vm194, nan, %v204
    %206 = vst [vmem:[#allocation2] sm:$0xff] %v205
    // Predicated region
    $region14: #{tpu_custom_call.1} parent=1 // pred_check
      _
    $region15: #{tpu_custom_call.1} parent=1 // pred_check_branch
      %208 = sbr.rel (0) target = $region17
    $region16: #{tpu_custom_call.1} parent=1 // pred_region
      %s210 = ssub.s32 128, 128
      %211 = vsyncadd [#allocation3], %s210
      %s213 = sshll.u32 [#allocation2], 4
      %s214 = int_to_ptr.vmem [resolvable:$true] %s213
      %216 = dma.vmem_to_hbm [thread:$0]  %s214, 128, %s3, [#allocation3]
    $region17: #{tpu_custom_call.1} parent=1 // pred_fallthru
      _
    // Predicated region
    $region18: #{tpu_custom_call.1} parent=1 // pred_check
      _
    $region19: #{tpu_custom_call.1} parent=1 // pred_check_branch
      %218 = sbr.rel (0) target = $region21
    $region20: #{tpu_custom_call.1} parent=1 // pred_region
      %219 = dma.done [#allocation3], 128
    $region21: #{tpu_custom_call.1} parent=1 // pred_fallthru
      _
    %220 = vsyncpa [#allocation3], 1

</llo_original>
